<compile_context>
chip_gen: v5e
topology: v5e:2x2
jax: 0.10.0
libtpu: 0.0.40
codegen_flags: <defaults>
</compile_context>

<pallas_src>
import jax
import jax.numpy as jnp
from jax.experimental import pallas as pl
from jax.experimental.pallas import tpu as pltpu

CLASS_NUM = 2
ALPHA = 0.2
GAMMA = 1.5          # hard-coded below as omp * sqrt(omp)
USE_ALPHA = False
SIZE_AVERAGE = True

_LANES = 128
_SUBLANES = 8
_MAX_TILE_ROWS = 2048      # 2048 x 128 x 4 B = 1 MiB per input buffer (x2 double-buffered)
_PAD_SENTINEL = 1.0e9      # sigmoid(sentinel) == 1  ->  loss == 0


def _cdiv(a, b):
    return -(-a // b)


def _round_up(a, b):
    return _cdiv(a, b) * b


def _tensorcores_per_chip():
    """Best-effort TensorCore count per chip (v4/v5p/v7x: 2; v5e/v6e: 1)."""
    try:
        kind = jax.devices()[0].device_kind.lower()
    except Exception:
        return 1
    return 2 if any(t in kind for t in ("v4", "v5p", "v7", "7x")) else 1


def _focal_loss_kernel(signed_ref, out_ref):
    """One (tile_rows, 128) tile of signed target logits.

    signed = logit(target_class) - logit(other_class), so the 2-class softmax
    probability of the target class is sigmoid(signed).  Padding rows and
    out-of-range targets carry a large positive sentinel: prob -> 1, loss -> 0.
    Accumulates into the resident (8, 128) output block for this core.
    """
    s = pl.program_id(1)

    @pl.when(s == 0)
    def _init():
        out_ref[...] = jnp.zeros_like(out_ref)

    signed = signed_ref[...]

    # sigmoid via one tanh EUP push (instead of exp + divide): 3 EUP ops/elem total.
    prob_t = 0.5 * (1.0 + jnp.tanh(0.5 * signed))
    # prob.clamp(min=0.0001, max=1.0); the upper clamp is a no-op after softmax.
    prob_t = jnp.maximum(prob_t, 0.0001)

    omp = 1.0 - prob_t
    modulating = omp * jnp.sqrt(omp)            # (1 - p) ** 1.5
    loss = modulating * (-jnp.log(prob_t))
    if USE_ALPHA:
        loss = jnp.float32(ALPHA) * loss

    # VPU-only accumulation: fold the tile down to a single (8, 128) vreg block.
    out_ref[...] += jnp.sum(loss.reshape(-1, _SUBLANES, _LANES), axis=0)


def focal_loss(pred, target):
    """pred: (..., CLASS_NUM) float; target: (...,) int. Returns scalar f32."""
    pred2 = pred.reshape(-1, CLASS_NUM).astype(jnp.float32)
    tgt1 = target.reshape(-1).astype(jnp.int32)
    n = pred2.shape[0]

    # Fold class axis + target into ONE lane-dense f32 slab (fused with the pad).
    diff = pred2[:, 1] - pred2[:, 0]
    signed = jnp.where(tgt1 == 1, diff,
                       jnp.where(tgt1 == 0, -diff, jnp.float32(_PAD_SENTINEL)))

    # Grid sizing: pad only to splits * steps * tile_rows with tile_rows derived
    # from n (multiple of 8), so padding waste is at most a few sublane rows.
    rows_min = max(1, _cdiv(n, _LANES))
    splits = _tensorcores_per_chip()
    if rows_min < splits * _SUBLANES:
        splits = 1
    rows_per_split = _cdiv(rows_min, splits)
    steps_per_split = max(1, _cdiv(rows_per_split, _MAX_TILE_ROWS))
    tile_rows = _round_up(_cdiv(rows_per_split, steps_per_split), _SUBLANES)
    rows = splits * steps_per_split * tile_rows
    padded = rows * _LANES

    signed = jnp.pad(signed, (0, padded - n),
                     constant_values=_PAD_SENTINEL).reshape(rows, _LANES)

    in_map = lambda c, s: (c * steps_per_split + s, 0)

    partial = pl.pallas_call(
        _focal_loss_kernel,
        out_shape=jax.ShapeDtypeStruct((splits * _SUBLANES, _LANES), jnp.float32),
        grid=(splits, steps_per_split),
        in_specs=[pl.BlockSpec((tile_rows, _LANES), in_map)],
        out_specs=pl.BlockSpec((_SUBLANES, _LANES), lambda c, s: (c, 0)),
        compiler_params=pltpu.CompilerParams(
            dimension_semantics=("parallel", "arbitrary"),
        ),
        cost_estimate=pl.CostEstimate(
            flops=8 * padded,
            transcendentals=3 * padded,          # tanh, sqrt, log
            bytes_accessed=4 * padded + splits * _SUBLANES * _LANES * 4,
        ),
    )(signed)

    total = jnp.sum(partial)                 # tiny (splits*8, 128) reduce in XLA
    scale = (1.0 / n) if SIZE_AVERAGE else 1.0
    return total * jnp.float32(scale)


def focal_loss_ref(pred, target):
    """Pure-JAX reference (float32) mirroring the PyTorch forward."""
    pred2 = pred.reshape(-1, CLASS_NUM).astype(jnp.float32)
    prob = jax.nn.softmax(pred2, axis=1)
    prob = jnp.clip(prob, 0.0001, 1.0)
    onehot = jax.nn.one_hot(target.reshape(-1), CLASS_NUM, dtype=jnp.float32)
    scale = ALPHA if USE_ALPHA else 1.0
    batch_loss = -scale * jnp.power(1.0 - prob, GAMMA) * jnp.log(prob) * onehot
    row_loss = jnp.sum(batch_loss, axis=1)
    return jnp.mean(row_loss) if SIZE_AVERAGE else jnp.sum(row_loss)


if __name__ == "__main__":
    key = jax.random.PRNGKey(0)
    k1, k2, k3, k4 = jax.random.split(key, 4)

    # Small shape consistent with the module (flattened batch of 16 rows, 2 classes).
    n_small = 16
    pred_s = jax.random.normal(k1, (n_small, CLASS_NUM), dtype=jnp.float32)
    tgt_s = jax.random.randint(k2, (n_small,), 0, CLASS_NUM, dtype=jnp.int32)
    loss_s = focal_loss(pred_s, tgt_s)
    jax.block_until_ready(loss_s)
    ref_s = focal_loss_ref(pred_s, tgt_s)
    assert jnp.allclose(loss_s, ref_s, rtol=2e-4, atol=1e-6), (loss_s, ref_s)

    # Larger shape: exercises multi-step grid, dual-core split and sentinel padding.
    n_big = 300_000
    pred_b = jax.random.normal(k3, (n_big, CLASS_NUM), dtype=jnp.float32)
    tgt_b = jax.random.randint(k4, (n_big,), 0, CLASS_NUM, dtype=jnp.int32)
    loss_b = focal_loss(pred_b, tgt_b)
    jax.block_until_ready(loss_b)
    ref_b = focal_loss_ref(pred_b, tgt_b)
    assert jnp.allclose(loss_b, ref_b, rtol=2e-4, atol=1e-6), (loss_b, ref_b)

    print("KERNEL_OK")
</pallas_src>

<mosaic_0001>
module attributes {stable_mosaic.version = 11 : i64} {
  func.func @_focal_loss_kernel(%arg0: i32, %arg1: i32, %arg2: memref<8x128xf32, #tpu.memory_space<vmem>>, %arg3: memref<8x128xf32, #tpu.memory_space<vmem>>) attributes {dimension_semantics = [#tpu.dimension_semantics<parallel>, #tpu.dimension_semantics<arbitrary>], iteration_bounds = array<i64: 1, 1>, scalar_prefetch = 0 : i64, scratch_operands = 0 : i64, tpu.core_type = #tpu.core_type<tc>, window_params = [{transform_indices = @transform_0, window_bounds = array<i64: 8, 128>}, {transform_indices = @transform_1, window_bounds = array<i64: 8, 128>}]} {
    %c0_i32 = arith.constant 0 : i32
    %0 = arith.cmpi eq, %arg1, %c0_i32 : i32
    %1 = arith.extui %0 : i1 to i32
    %c0_i32_0 = arith.constant 0 : i32
    %2 = arith.cmpi ne, %1, %c0_i32_0 : i32
    scf.if %2 {
      %cst_12 = arith.constant 0.000000e+00 : f32
      %26 = vector.broadcast %cst_12 : f32 to vector<8x128xf32>
      %c0_13 = arith.constant 0 : index
      %c0_14 = arith.constant 0 : index
      %27 = vector.load %arg3[%c0_13, %c0_14] : memref<8x128xf32, #tpu.memory_space<vmem>>, vector<8x128xf32>
      tpu.vector_store %arg3[%c0_13, %c0_14], %26 {strides = array<i32>} : memref<8x128xf32, #tpu.memory_space<vmem>>, vector<8x128xf32>,
    } else {
    }
    %c0 = arith.constant 0 : index
    %c0_1 = arith.constant 0 : index
    %3 = vector.load %arg2[%c0, %c0_1] : memref<8x128xf32, #tpu.memory_space<vmem>>, vector<8x128xf32>
    %cst = arith.constant 5.000000e-01 : f32
    %4 = vector.broadcast %cst : f32 to vector<8x128xf32>
    %5 = arith.mulf %4, %3 : vector<8x128xf32>
    %6 = math.tanh %5 : vector<8x128xf32>
    %cst_2 = arith.constant 1.000000e+00 : f32
    %7 = vector.broadcast %cst_2 : f32 to vector<8x128xf32>
    %8 = arith.addf %7, %6 : vector<8x128xf32>
    %cst_3 = arith.constant 5.000000e-01 : f32
    %9 = vector.broadcast %cst_3 : f32 to vector<8x128xf32>
    %10 = arith.mulf %9, %8 : vector<8x128xf32>
    %cst_4 = arith.constant 9.99999974E-5 : f32
    %11 = vector.broadcast %cst_4 : f32 to vector<8x128xf32>
    %12 = arith.maximumf %10, %11 : vector<8x128xf32>
    %cst_5 = arith.constant 1.000000e+00 : f32
    %13 = vector.broadcast %cst_5 : f32 to vector<8x128xf32>
    %14 = arith.subf %13, %12 : vector<8x128xf32>
    %15 = math.sqrt %14 : vector<8x128xf32>
    %16 = arith.mulf %14, %15 : vector<8x128xf32>
    %17 = math.log %12 : vector<8x128xf32>
    %cst_6 = arith.constant 0.000000e+00 : f32
    %18 = vector.broadcast %cst_6 : f32 to vector<8x128xf32>
    %19 = arith.subf %18, %17 : vector<8x128xf32>
    %20 = arith.mulf %16, %19 : vector<8x128xf32>
    %c0_7 = arith.constant 0 : index
    %c0_8 = arith.constant 0 : index
    %21 = vector.load %arg3[%c0_7, %c0_8] : memref<8x128xf32, #tpu.memory_space<vmem>>, vector<8x128xf32>
    %22 = vector.shape_cast %20 : vector<8x128xf32> to vector<1x8x128xf32>
    %cst_9 = arith.constant dense<0.000000e+00> : vector<8x128xf32>
    %23 = vector.multi_reduction <add>, %22, %cst_9 [0] : vector<1x8x128xf32> to vector<8x128xf32>
    %24 = arith.addf %21, %23 : vector<8x128xf32>
    %c0_10 = arith.constant 0 : index
    %c0_11 = arith.constant 0 : index
    %25 = vector.load %arg3[%c0_10, %c0_11] : memref<8x128xf32, #tpu.memory_space<vmem>>, vector<8x128xf32>
    tpu.vector_store %arg3[%c0_10, %c0_11], %24 {strides = array<i32>} : memref<8x128xf32, #tpu.memory_space<vmem>>, vector<8x128xf32>,
    return
  }
  func.func @transform_0(%arg0: i32, %arg1: i32) -> (i32, i32) {
    %c1_i32 = arith.constant 1 : i32
    %0 = arith.muli %arg0, %c1_i32 : i32
    %1 = arith.addi %0, %arg1 : i32
    %c0_i32 = arith.constant 0 : i32
    %c0_i32_0 = arith.constant 0 : i32
    return %1, %c0_i32 : i32, i32
  }
  func.func @transform_1(%arg0: i32, %arg1: i32) -> (i32, i32) {
    %c0_i32 = arith.constant 0 : i32
    %c0_i32_0 = arith.constant 0 : i32
    return %arg0, %c0_i32 : i32, i32
  }
}

</mosaic_0001>

<llo_original>
// kernel: tpu_custom_call.1
$region0: #{tpu_custom_call.1}
  #allocation0 [shape = 'u32[]', space=smem, size = 0x4, offset = 0x4, fixed_abs, tag = 'smem constant byte address 0x4 - core index']
  #allocation1 [shape = 'u32[72,128]{1,0:T(1,128)}', space=vmem, size = 0x9000, scoped, tag = 'internal scratch']
  %s0 = inlined_call_operand.hbm [shape: f32[8,128], index: 0, kind: input, shape index: {}]
  %s1 = inlined_call_operand.hbm [shape: f32[8,128], index: 1, kind: output, shape index: {}]
  %s2 = sld [smem:[#allocation0]]
  $region22: #{tpu_custom_call.1} parent=0
    _
  %s4 = ssub.s32 1, %s2
  %s5 = scalar_select 0, %s4, %s2
  $region1: #{tpu_custom_call.1} parent=0
    #allocation2 [shape = 'u8[4096]{0}', space=vmem, size = 0x1000, scoped, tag = 'input window, operand 0, single buffered']
    #allocation3 [shape = 's32[1]{0}', space=sflag, size = 0x4, scoped, tag = 'scoped memory for tpu_custom_call.1']
    #allocation4 [shape = 's32[1]{0}', space=sflag, size = 0x4, scoped, tag = 'scoped memory for tpu_custom_call.1']
    #allocation5 [shape = 'u8[4096]{0}', space=vmem, size = 0x1000, scoped, tag = 'output window, operand 0, single buffered']
    %6 = vsyncpa [#allocation3], 0
    %7 = vsyncpa [#allocation4], 0
    // Predicated region
    $region2: #{tpu_custom_call.1} parent=1 // pred_check
      _
    $region3: #{tpu_custom_call.1} parent=1 // pred_check_branch
      %9 = sbr.rel (0) target = $region5
    $region4: #{tpu_custom_call.1} parent=1 // pred_region
      %s10 = sadd.s32 0, 0
      %12 = vsyncadd [#allocation3], 0
      %s13 = smul.addr %s10, 8
      %s14 = scalar_lea.hbm %s0, %s13
      %s16 = sshll.u32 %s14, 4
      %s17 = int_to_ptr.hbm [resolvable:$true] %s16
      %s18 = sshll.u32 [#allocation2], 4
      %s19 = int_to_ptr.vmem [resolvable:$true] %s18
      %21 = dma.hbm_to_vmem [thread:$0]  %s17, 128, %s19, [#allocation3]
    $region5: #{tpu_custom_call.1} parent=1 // pred_fallthru
      _
    // Predicated region
    $region6: #{tpu_custom_call.1} parent=1 // pred_check
      _
    $region7: #{tpu_custom_call.1} parent=1 // pred_check_branch
      %23 = sbr.rel (0) target = $region9
    $region8: #{tpu_custom_call.1} parent=1 // pred_region
      %25 = dma.done [#allocation3], 128
    $region9: #{tpu_custom_call.1} parent=1 // pred_fallthru
      _
    %s26 = sadd.s32 0, 0
    %p27 = scmp.eq.s32.totalorder 0, 0
    // Predicated region
    $region10: #{tpu_custom_call.1} parent=1 // pred_check
      %p28 = pneg %p27
    $region11: #{tpu_custom_call.1} parent=1 // pred_check_branch
      %30 = sbr.rel (%p28) target = $region13
    $region12: #{tpu_custom_call.1} parent=1 // pred_region
      %31 = vst [vmem:[#allocation5] sm:$0xff] 0.0
    $region13: #{tpu_custom_call.1} parent=1 // pred_fallthru
      _
    %v32 = vld [vmem:[#allocation2] sm:$0xff]
    %v33 = vmul.f32 %v32, 0.5
    %v34 = vtanh.pop %v33
    %v35 = vadd.f32 %v34, 1.0
    %v36 = vmul.f32 %v35, 0.5
    %v37 = vmax.f32 %v36, 0.0001
    %v38 = vsub.f32 1.0, %v37
    %v39 = vrsqrt.pop %v38
    %v40 = vmul.f32 %v39, %v38
    %v41 = vmul.f32 %v40, %v39
    %v42 = vmul.f32 0.5, %v41
    %v43 = vsub.f32 1.5, %v42
    %v44 = vmul.f32 %v39, %v43
    %v45 = vmul.f32 %v38, %v44
    %vm46 = vcmp.eq.f32.partialorder %v38, inf
    %v47 = vsel %vm46, %v38, %v45
    %vm48 = vcmp.eq.f32.partialorder %v38, 0.0
    %v49 = vand.u32 %v38, 2147483648
    %v50 = vsel %vm48, %v49, %v47
    %v51 = vmul.f32 %v38, %v50
    %v52 = vlog2.pop %v37
    %v53 = vmul.f32 %v52, 0.6931472
    %v54 = vsub.f32 0.0, %v53
    %v55 = vmul.f32 %v51, %v54
    %v56 = vld [vmem:[#allocation5] sm:$0xff]
    %v57 = vadd.f32 %v55, 0.0
    %v58 = vadd.f32 %v56, %v57
    %59 = vst [vmem:[#allocation5] sm:$0xff] %v58
    // Predicated region
    $region14: #{tpu_custom_call.1} parent=1 // pred_check
      _
    $region15: #{tpu_custom_call.1} parent=1 // pred_check_branch
      %61 = sbr.rel (0) target = $region17
    $region16: #{tpu_custom_call.1} parent=1 // pred_region
      %63 = vsyncadd [#allocation4], 0
      %s65 = sshll.u32 [#allocation5], 4
      %s66 = int_to_ptr.vmem [resolvable:$true] %s65
      %s67 = sshll.u32 %s1, 4
      %s68 = int_to_ptr.hbm [resolvable:$true] %s67
      %70 = dma.vmem_to_hbm [thread:$0]  %s66, 128, %s68, [#allocation4]
    $region17: #{tpu_custom_call.1} parent=1 // pred_fallthru
      _
    // Predicated region
    $region18: #{tpu_custom_call.1} parent=1 // pred_check
      _
    $region19: #{tpu_custom_call.1} parent=1 // pred_check_branch
      %72 = sbr.rel (0) target = $region21
    $region20: #{tpu_custom_call.1} parent=1 // pred_region
      %74 = dma.done [#allocation4], 128
    $region21: #{tpu_custom_call.1} parent=1 // pred_fallthru
      _
    %75 = vsyncpa [#allocation3], 1
    %76 = vsyncpa [#allocation4], 1

</llo_original>
